<compile_context>
chip_gen: v6e
topology: v6e:2x2x1
jax: 0.10.0
libtpu: 0.0.40
codegen_flags: <defaults>
</compile_context>

<pallas_src>
import functools
import math

import jax
import jax.numpy as jnp
from jax.experimental import pallas as pl
from jax.experimental.pallas import tpu as pltpu


# Even Taylor coefficients of cos(z) up to z^10, highest order first (Horner).
_COS_EVEN_COEFFS = (
    -2.7557319e-07,   # -1/10!
    +2.4801587e-05,   # +1/8!
    -1.3888889e-03,   # -1/6!
    +4.1666668e-02,   # +1/4!
    -5.0e-01,         # -1/2!
    +1.0,
)


def _cosine_cutoff_kernel(d_ref, o_ref, *, cutoff):
    """Elementwise Behler cosine cutoff on one VMEM tile (compute in f32).

    Uses 0.5*(cos(pi*d/rc)+1) == cos(pi*d/(2*rc))^2 with the argument clamped
    to [0, pi/2], so a short even polynomial replaces the generic cos lowering.
    """
    d = d_ref[...].astype(jnp.float32)
    z = jnp.clip(d, 0.0, cutoff) * (math.pi / (2.0 * cutoff))   # z in [0, pi/2]
    u = z * z
    p = _COS_EVEN_COEFFS[0]
    for c in _COS_EVEN_COEFFS[1:]:
        p = p * u + c                       # p ~= cos(z)
    val = p * p                             # == 0.5*(cos(pi*d/cutoff)+1)
    # NOTE: the mask compares the f32 upcast of d; for bf16 inputs a value that
    # rounds across the cutoff differs negligibly (the result is ~0 either way).
    o_ref[...] = jnp.where(d < cutoff, val, 0.0).astype(o_ref.dtype)


def _vmem_capacity_bytes() -> int:
    """Per-core VMEM capacity; conservative (v7x) default if unavailable."""
    try:
        return int(getattr(pltpu.get_tpu_info(), "vmem_capacity_bytes",
                           64 * 1024 * 1024))
    except Exception:  # e.g. interpret mode / non-TPU tracing environments
        return 64 * 1024 * 1024


def cosine_attenuation_function(d_ij: jax.Array,
                                cutoff: float,
                                *,
                                force_kernel: bool = False,
                                min_pallas_elements: int = 16 * 1024
                                ) -> jax.Array:
    """Cosine cutoff: 0.5*(cos(pi*d/cutoff)+1) * (d < cutoff), shape-preserving.

    Args:
      d_ij: pairwise distances, canonically [n_pairs, 1] (any shape accepted).
            For the zero-copy path, allocate n_pairs as a multiple of 128.
      cutoff: cutoff distance (same units as d_ij), static Python float.
      force_kernel: force the Pallas path even for tiny inputs (for testing).
    """
    cutoff = float(cutoff)
    orig_shape = d_ij.shape
    dtype = d_ij.dtype
    n = d_ij.size

    # Small-input fast path: launch + single-step pipeline overhead exceeds the
    # whole computation at these sizes; let XLA fuse it instead.
    if n < min_pallas_elements and not force_kernel:
        df = d_ij.astype(jnp.float32)
        val = 0.5 * (jnp.cos(df * (math.pi / cutoff)) + 1.0)
        return jnp.where(df < cutoff, val, 0.0).astype(dtype)

    itemsize = jnp.dtype(dtype).itemsize
    sublane_align = max(8, 32 // itemsize)      # 8 f32, 16 bf16, 32 int8/fp8
    lane_w = 128                                 # full, unmasked vst per vreg

    # Lane-dense slab view of the flat data. If n is a 128-multiple this is a
    # pure reshape (no HBM traffic); otherwise pad only to the next 128-multiple.
    # TODO(synk): upstream should allocate n_pairs as a multiple of 128 so the
    # pad/slice fallback is never taken.
    flat = d_ij.reshape(-1)
    padded = (n % lane_w) != 0
    if padded:
        pad_to = pl.cdiv(n, lane_w) * lane_w
        flat = jnp.pad(flat, (0, pad_to - n))
        rows = pad_to // lane_w
    else:
        rows = n // lane_w
    slab = flat.reshape(rows, lane_w)

    # Block sizing from per-generation VMEM: ~vmem/8 per block (8 MiB on v7x's
    # 64 MiB, 16 MiB on v5e/v6e's 128 MiB); 2 refs x 2 pipeline buffers fit
    # under the raised vmem limit while amortizing per-step overhead.
    vmem_bytes = _vmem_capacity_bytes()
    block_bytes = max(4 * 1024 * 1024, min(vmem_bytes // 8, 16 * 1024 * 1024))
    vmem_limit = min(vmem_bytes * 3 // 4, 4 * block_bytes + 4 * 1024 * 1024)

    row_tile = block_bytes // (itemsize * lane_w)
    row_tile = max(sublane_align, (row_tile // sublane_align) * sublane_align)
    rows_aligned = pl.cdiv(rows, sublane_align) * sublane_align
    row_tile = min(row_tile, rows_aligned)

    grid = (pl.cdiv(rows, row_tile),)   # ragged last block masked by Pallas
    kernel = functools.partial(_cosine_cutoff_kernel, cutoff=cutoff)

    n_elems = rows * lane_w
    out_slab = pl.pallas_call(
        kernel,
        out_shape=jax.ShapeDtypeStruct((rows, lane_w), dtype),
        grid=grid,
        in_specs=[pl.BlockSpec((row_tile, lane_w), lambda i: (i, 0))],
        out_specs=pl.BlockSpec((row_tile, lane_w), lambda i: (i, 0)),
        compiler_params=pltpu.CompilerParams(
            dimension_semantics=("parallel",),       # megacore sharding on v7x
            vmem_limit_bytes=int(vmem_limit)),
        cost_estimate=pl.CostEstimate(
            flops=15 * n_elems,
            transcendentals=0,
            bytes_accessed=2 * n_elems * itemsize),
    )(slab)

    if padded:
        return out_slab.reshape(-1)[:n].reshape(orig_shape)
    return out_slab.reshape(orig_shape)


if __name__ == "__main__":
    key = jax.random.PRNGKey(0)
    cutoff_nm = 0.5  # cutoff distance in nanometers (the module's buffer)

    def reference(d):
        v = 0.5 * (jnp.cos(d * jnp.pi / cutoff_nm) + 1.0)
        return v * (d < cutoff_nm).astype(d.dtype)

    # Small, module-consistent shape: [n_pairs, 1] distances in [0, 0.8] nm so
    # some pairs exceed the cutoff and exercise the zeroing branch.
    # n_pairs is a 128-multiple -> zero-copy (reshape-only) kernel path.
    n_pairs = 1024
    d_ij = jax.random.uniform(key, (n_pairs, 1), dtype=jnp.float32,
                              minval=0.0, maxval=0.8)

    fn = jax.jit(lambda d: cosine_attenuation_function(
        d, cutoff_nm, force_kernel=True))
    out = jax.block_until_ready(fn(d_ij))
    ref = reference(d_ij)
    assert out.shape == d_ij.shape and out.dtype == d_ij.dtype
    assert float(jnp.max(jnp.abs(out - ref))) < 1e-5

    # Non-128-multiple n_pairs exercises the pad fallback path.
    d_ragged = d_ij[:1000]
    out_r = jax.block_until_ready(
        jax.jit(lambda d: cosine_attenuation_function(
            d, cutoff_nm, force_kernel=True))(d_ragged))
    assert out_r.shape == d_ragged.shape
    assert float(jnp.max(jnp.abs(out_r - reference(d_ragged)))) < 1e-5

    # Small-input XLA fast path parity.
    out_s = cosine_attenuation_function(d_ij, cutoff_nm)
    assert float(jnp.max(jnp.abs(out_s - ref))) < 1e-5

    print("KERNEL_OK")
</pallas_src>

<mosaic_0001>
module attributes {stable_mosaic.version = 11 : i64} {
  func.func @_cosine_cutoff_kernel(%arg0: i32, %arg1: memref<8x128xf32, #tpu.memory_space<vmem>>, %arg2: memref<8x128xf32, #tpu.memory_space<vmem>>) attributes {dimension_semantics = [#tpu.dimension_semantics<parallel>], iteration_bounds = array<i64: 1>, scalar_prefetch = 0 : i64, scratch_operands = 0 : i64, tpu.core_type = #tpu.core_type<tc>, window_params = [{transform_indices = @transform_0, window_bounds = array<i64: 8, 128>}, {transform_indices = @transform_1, window_bounds = array<i64: 8, 128>}]} {
    %c0 = arith.constant 0 : index
    %c0_0 = arith.constant 0 : index
    %0 = vector.load %arg1[%c0, %c0_0] : memref<8x128xf32, #tpu.memory_space<vmem>>, vector<8x128xf32>
    %cst = arith.constant 0.000000e+00 : f32
    %cst_1 = arith.constant 5.000000e-01 : f32
    %1 = vector.broadcast %cst : f32 to vector<8x128xf32>
    %2 = arith.maximumf %1, %0 : vector<8x128xf32>
    %3 = vector.broadcast %cst_1 : f32 to vector<8x128xf32>
    %4 = arith.minimumf %3, %2 : vector<8x128xf32>
    %cst_2 = arith.constant 3.14159274 : f32
    %5 = vector.broadcast %cst_2 : f32 to vector<8x128xf32>
    %6 = arith.mulf %4, %5 : vector<8x128xf32>
    %7 = arith.mulf %6, %6 : vector<8x128xf32>
    %cst_3 = arith.constant -2.755732E-7 : f32
    %8 = vector.broadcast %cst_3 : f32 to vector<8x128xf32>
    %9 = arith.mulf %8, %7 : vector<8x128xf32>
    %cst_4 = arith.constant 2.48015876E-5 : f32
    %10 = vector.broadcast %cst_4 : f32 to vector<8x128xf32>
    %11 = arith.addf %9, %10 : vector<8x128xf32>
    %12 = arith.mulf %11, %7 : vector<8x128xf32>
    %cst_5 = arith.constant -0.00138888892 : f32
    %13 = vector.broadcast %cst_5 : f32 to vector<8x128xf32>
    %14 = arith.addf %12, %13 : vector<8x128xf32>
    %15 = arith.mulf %14, %7 : vector<8x128xf32>
    %cst_6 = arith.constant 0.0416666679 : f32
    %16 = vector.broadcast %cst_6 : f32 to vector<8x128xf32>
    %17 = arith.addf %15, %16 : vector<8x128xf32>
    %18 = arith.mulf %17, %7 : vector<8x128xf32>
    %cst_7 = arith.constant -5.000000e-01 : f32
    %19 = vector.broadcast %cst_7 : f32 to vector<8x128xf32>
    %20 = arith.addf %18, %19 : vector<8x128xf32>
    %21 = arith.mulf %20, %7 : vector<8x128xf32>
    %cst_8 = arith.constant 1.000000e+00 : f32
    %22 = vector.broadcast %cst_8 : f32 to vector<8x128xf32>
    %23 = arith.addf %21, %22 : vector<8x128xf32>
    %24 = arith.mulf %23, %23 : vector<8x128xf32>
    %cst_9 = arith.constant 5.000000e-01 : f32
    %25 = vector.broadcast %cst_9 : f32 to vector<8x128xf32>
    %26 = arith.cmpf olt, %0, %25 : vector<8x128xf32>
    %cst_10 = arith.constant 0.000000e+00 : f32
    %27 = vector.broadcast %cst_10 : f32 to vector<8x128xf32>
    %28 = arith.select %26, %24, %27 : vector<8x128xi1>, vector<8x128xf32>
    %c0_11 = arith.constant 0 : index
    %c0_12 = arith.constant 0 : index
    %29 = vector.load %arg2[%c0_11, %c0_12] : memref<8x128xf32, #tpu.memory_space<vmem>>, vector<8x128xf32>
    tpu.vector_store %arg2[%c0_11, %c0_12], %28 {strides = array<i32>} : memref<8x128xf32, #tpu.memory_space<vmem>>, vector<8x128xf32>,
    return
  }
  func.func @transform_0(%arg0: i32) -> (i32, i32) {
    %c0_i32 = arith.constant 0 : i32
    %c0_i32_0 = arith.constant 0 : i32
    return %arg0, %c0_i32 : i32, i32
  }
  func.func @transform_1(%arg0: i32) -> (i32, i32) {
    %c0_i32 = arith.constant 0 : i32
    %c0_i32_0 = arith.constant 0 : i32
    return %arg0, %c0_i32 : i32, i32
  }
}

</mosaic_0001>

<llo_original>
// kernel: _lambda_.1
$region0: #{_lambda_.1}
  #allocation0 [shape = 'u32[]', space=smem, size = 0x4, offset = 0x4, fixed_abs, tag = 'smem constant byte address 0x4 - core index']
  #allocation1 [shape = 'u32[144,128]{1,0:T(1,128)}', space=vmem, size = 0x12000, scoped, tag = 'internal scratch']
  %s0 = inlined_call_operand.hbm [shape: f32[8,128], index: 0, kind: input, shape index: {}]
  %s1 = inlined_call_operand.hbm [shape: f32[8,128], index: 1, kind: output, shape index: {}]
  %s2 = sld [smem:[#allocation0]]
  $region18: #{_lambda_.1} parent=0
    _
  %s4 = ssub.s32 1, %s2
  %s5 = scalar_select 0, %s4, %s2
  $region1: #{_lambda_.1} parent=0
    #allocation2 [shape = 'u8[4096]{0}', space=vmem, size = 0x1000, scoped, tag = 'input window, operand 0, single buffered']
    #allocation3 [shape = 's32[1]{0}', space=sflag, size = 0x4, scoped, tag = 'scoped memory for _lambda_.1']
    #allocation4 [shape = 's32[1]{0}', space=sflag, size = 0x4, scoped, tag = 'scoped memory for _lambda_.1']
    #allocation5 [shape = 'u8[4096]{0}', space=vmem, size = 0x1000, scoped, tag = 'output window, operand 0, single buffered']
    %6 = vsyncpa [#allocation3], 0
    %7 = vsyncpa [#allocation4], 0
    // Predicated region
    $region2: #{_lambda_.1} parent=1 // pred_check
      _
    $region3: #{_lambda_.1} parent=1 // pred_check_branch
      %9 = sbr.rel (0) target = $region5
    $region4: #{_lambda_.1} parent=1 // pred_region
      %s11 = ssub.s32 128, 128
      %12 = vsyncadd [#allocation3], %s11
      %s14 = sshll.u32 [#allocation2], 4
      %s15 = int_to_ptr.vmem [resolvable:$true] %s14
      %17 = dma.hbm_to_vmem [thread:$0]  %s0, 128, %s15, [#allocation3]
    $region5: #{_lambda_.1} parent=1 // pred_fallthru
      _
    // Predicated region
    $region6: #{_lambda_.1} parent=1 // pred_check
      _
    $region7: #{_lambda_.1} parent=1 // pred_check_branch
      %19 = sbr.rel (0) target = $region9
    $region8: #{_lambda_.1} parent=1 // pred_region
      %20 = dma.done [#allocation3], 128
    $region9: #{_lambda_.1} parent=1 // pred_fallthru
      _
    %v21 = vld [vmem:[#allocation2] sm:$0xff]
    %v22 = vmax.f32 %v21, 0.0
    %v23 = vmin.f32 %v22, 0.5
    %v24 = vmul.f32 %v23, 3.1415927
    %v25 = vmul.f32 %v24, %v24
    %v26 = vmul.f32 %v25, -2.755732e-07
    %v27 = vadd.f32 %v26, 2.4801588e-05
    %v28 = vmul.f32 %v27, %v25
    %v29 = vadd.f32 %v28, -0.0013888889
    %v30 = vmul.f32 %v29, %v25
    %v31 = vadd.f32 %v30, 0.041666668
    %v32 = vmul.f32 %v31, %v25
    %v33 = vadd.f32 %v32, -0.5
    %v34 = vmul.f32 %v33, %v25
    %v35 = vadd.f32 %v34, 1.0
    %v36 = vmul.f32 %v35, %v35
    %vm37 = vcmp.lt.f32.partialorder %v21, 0.5
    %v38 = vsel %vm37, %v36, 0.0
    %39 = vst [vmem:[#allocation5] sm:$0xff] %v38
    // Predicated region
    $region10: #{_lambda_.1} parent=1 // pred_check
      _
    $region11: #{_lambda_.1} parent=1 // pred_check_branch
      %41 = sbr.rel (0) target = $region13
    $region12: #{_lambda_.1} parent=1 // pred_region
      %s43 = ssub.s32 128, 128
      %44 = vsyncadd [#allocation4], %s43
      %s46 = sshll.u32 [#allocation5], 4
      %s47 = int_to_ptr.vmem [resolvable:$true] %s46
      %49 = dma.vmem_to_hbm [thread:$0]  %s47, 128, %s1, [#allocation4]
    $region13: #{_lambda_.1} parent=1 // pred_fallthru
      _
    // Predicated region
    $region14: #{_lambda_.1} parent=1 // pred_check
      _
    $region15: #{_lambda_.1} parent=1 // pred_check_branch
      %51 = sbr.rel (0) target = $region17
    $region16: #{_lambda_.1} parent=1 // pred_region
      %52 = dma.done [#allocation4], 128
    $region17: #{_lambda_.1} parent=1 // pred_fallthru
      _
    %53 = vsyncpa [#allocation3], 1
    %54 = vsyncpa [#allocation4], 1

</llo_original>
